<compile_context>
chip_gen: v5e
topology: v5e:2x2
jax: 0.10.0
libtpu: 0.0.40
codegen_flags: <defaults>
</compile_context>

<pallas_src>
import functools

import jax
import jax.numpy as jnp
from jax.experimental import pallas as pl
from jax.experimental.pallas import tpu as pltpu


def _layernorm_kernel(x_ref, w_ref, b_ref, o_ref, *, eps):
    # x_ref: (row_block, hidden); w_ref/b_ref: (1, hidden) broadcast over rows.
    x = x_ref[...].astype(jnp.float32)
    mean = jnp.mean(x, axis=-1, keepdims=True)
    xc = x - mean
    # Biased variance == (x - mean).pow(2).mean(-1), exactly as the PyTorch module.
    var = jnp.mean(xc * xc, axis=-1, keepdims=True)
    inv = jax.lax.rsqrt(var + eps)                     # EUP op: own VLIW slot
    w = w_ref[...].astype(jnp.float32)                 # cast once per block
    b = b_ref[...].astype(jnp.float32)
    o_ref[...] = (xc * inv * w + b).astype(o_ref.dtype)


def _sublane_align(itemsize):
    # f32 -> 8, bf16 -> 16, int8/fp8 -> 32 (packed sublanes)
    return max(8, 32 // itemsize)


def _pick_row_block(hidden, itemsize):
    """Pick a row tile keeping live VMEM <= ~12 MiB (safe on v5e's 16 MiB scoped
    default, comfortably under v6e/v7x's 32 MiB) while large enough to amortize the
    ~0.35 us/step grid overhead."""
    budget_bytes = 12 * 1024 * 1024
    # Per row: double-buffered input + double-buffered output (2 * 2 * itemsize bytes
    # each) plus ~3 f32 temporaries (widened x, centered, scaled) at 4 bytes.
    per_row = hidden * (4 * itemsize + 3 * 4)
    rb = max(1, budget_bytes // per_row)
    rb = min(rb, 1024)
    align = _sublane_align(itemsize)
    rb = max(align, (rb // align) * align)
    return rb


def bert_layer_norm(x, weight, bias, eps=1e-12, row_block=None):
    """x: (..., hidden). weight, bias: (hidden,). Returns same shape/dtype as x."""
    orig_shape = x.shape
    hidden = orig_shape[-1]
    rows = 1
    for d in orig_shape[:-1]:
        rows *= d

    x2 = x.reshape(rows, hidden)
    w2 = weight.reshape(1, hidden)
    b2 = bias.reshape(1, hidden)

    itemsize = jnp.dtype(x.dtype).itemsize
    align = _sublane_align(itemsize)

    if row_block is None:
        row_block = _pick_row_block(hidden, itemsize)
    # Never tile beyond the (sublane-rounded) row count; keep sublane alignment.
    row_block = min(row_block, ((rows + align - 1) // align) * align)
    row_block = max(align, (row_block // align) * align)

    # Pad rows up to a multiple of row_block instead of asserting divisibility.
    # LayerNorm is row-independent, so padded (zero) rows are simply discarded below.
    padded_rows = ((rows + row_block - 1) // row_block) * row_block
    if padded_rows != rows:
        x2 = jnp.pad(x2, ((0, padded_rows - rows), (0, 0)))

    grid = (padded_rows // row_block,)

    out = pl.pallas_call(
        functools.partial(_layernorm_kernel, eps=eps),
        out_shape=jax.ShapeDtypeStruct((padded_rows, hidden), x.dtype),
        grid_spec=pltpu.PrefetchScalarGridSpec(
            num_scalar_prefetch=0,
            grid=grid,
            in_specs=[
                pl.BlockSpec((row_block, hidden), lambda i: (i, 0)),
                pl.BlockSpec((1, hidden), lambda i: (0, 0)),  # resident, no re-DMA
                pl.BlockSpec((1, hidden), lambda i: (0, 0)),
            ],
            out_specs=pl.BlockSpec((row_block, hidden), lambda i: (i, 0)),
        ),
        compiler_params=pltpu.CompilerParams(
            dimension_semantics=("parallel",),  # shard grid steps across TCs on v7x
        ),
    )(x2, w2, b2)

    if padded_rows != rows:
        out = out[:rows]
    return out.reshape(orig_shape)


def _reference_layernorm(x, weight, bias, eps):
    mean = jnp.mean(x, axis=-1, keepdims=True)
    var = jnp.mean((x - mean) ** 2, axis=-1, keepdims=True)
    return weight * ((x - mean) / jnp.sqrt(var + eps)) + bias


if __name__ == "__main__":
    key = jax.random.PRNGKey(0)

    # Small shape consistent with the module: (batch, seq, hidden).
    batch, seq, hidden = 2, 8, 32
    k0, k1 = jax.random.split(key)
    x = jax.random.normal(k0, (batch, seq, hidden), dtype=jnp.float32)
    weight = jnp.ones((hidden,), dtype=jnp.float32)   # nn.Parameter(torch.ones)
    bias = jnp.zeros((hidden,), dtype=jnp.float32)    # nn.Parameter(torch.zeros)

    y = bert_layer_norm(x, weight, bias, eps=1e-12)
    y = jax.block_until_ready(y)
    ref = _reference_layernorm(x, weight, bias, 1e-12)
    assert jnp.allclose(y, ref, atol=1e-5, rtol=1e-5), "mismatch vs reference (case 1)"

    # Second case exercises the padded-rows path (rows = 3*7 = 21, not a multiple of 8)
    # and non-trivial weight/bias.
    x2 = jax.random.normal(k1, (3, 7, hidden), dtype=jnp.float32)
    w2 = 0.5 + 0.01 * jnp.arange(hidden, dtype=jnp.float32)
    b2 = 0.1 * jnp.arange(hidden, dtype=jnp.float32)
    y2 = bert_layer_norm(x2, w2, b2, eps=1e-12)
    y2 = jax.block_until_ready(y2)
    ref2 = _reference_layernorm(x2, w2, b2, 1e-12)
    assert jnp.allclose(y2, ref2, atol=1e-5, rtol=1e-5), "mismatch vs reference (case 2)"

    print("KERNEL_OK")
</pallas_src>

<mosaic_0001>
module attributes {stable_mosaic.version = 11 : i64} {
  func.func @_layernorm_kernel(%arg0: i32, %arg1: memref<16x32xf32, #tpu.memory_space<vmem>>, %arg2: memref<1x32xf32, #tpu.memory_space<vmem>>, %arg3: memref<1x32xf32, #tpu.memory_space<vmem>>, %arg4: memref<16x32xf32, #tpu.memory_space<vmem>>) attributes {dimension_semantics = [#tpu.dimension_semantics<parallel>], iteration_bounds = array<i64: 1>, scalar_prefetch = 0 : i64, scratch_operands = 0 : i64, tpu.core_type = #tpu.core_type<tc>, window_params = [{transform_indices = @transform_0, window_bounds = array<i64: 16, 32>}, {pipeline_mode = #tpu.pipeline_mode<synchronous>, transform_indices = @transform_1, window_bounds = array<i64: 1, 32>}, {pipeline_mode = #tpu.pipeline_mode<synchronous>, transform_indices = @transform_2, window_bounds = array<i64: 1, 32>}, {transform_indices = @transform_3, window_bounds = array<i64: 16, 32>}]} {
    %c0 = arith.constant 0 : index
    %c0_0 = arith.constant 0 : index
    %0 = vector.load %arg1[%c0, %c0_0] : memref<16x32xf32, #tpu.memory_space<vmem>>, vector<16x32xf32>
    %cst = arith.constant dense<0.000000e+00> : vector<16xf32>
    %1 = vector.multi_reduction <add>, %0, %cst [1] : vector<16x32xf32> to vector<16xf32>
    %2 = vector.shape_cast %1 : vector<16xf32> to vector<16x1xf32>
    %cst_1 = arith.constant 3.200000e+01 : f32
    %3 = vector.broadcast %cst_1 : f32 to vector<16x1xf32>
    %4 = arith.divf %2, %3 : vector<16x1xf32>
    %5 = vector.broadcast %4 : vector<16x1xf32> to vector<16x32xf32>
    %6 = arith.subf %0, %5 : vector<16x32xf32>
    %7 = arith.mulf %6, %6 : vector<16x32xf32>
    %cst_2 = arith.constant dense<0.000000e+00> : vector<16xf32>
    %8 = vector.multi_reduction <add>, %7, %cst_2 [1] : vector<16x32xf32> to vector<16xf32>
    %9 = vector.shape_cast %8 : vector<16xf32> to vector<16x1xf32>
    %cst_3 = arith.constant 3.200000e+01 : f32
    %10 = vector.broadcast %cst_3 : f32 to vector<16x1xf32>
    %11 = arith.divf %9, %10 : vector<16x1xf32>
    %cst_4 = arith.constant 9.99999996E-13 : f32
    %12 = vector.broadcast %cst_4 : f32 to vector<16x1xf32>
    %13 = arith.addf %11, %12 : vector<16x1xf32>
    %14 = math.rsqrt %13 : vector<16x1xf32>
    %c0_5 = arith.constant 0 : index
    %c0_6 = arith.constant 0 : index
    %15 = vector.load %arg2[%c0_5, %c0_6] : memref<1x32xf32, #tpu.memory_space<vmem>>, vector<1x32xf32>
    %c0_7 = arith.constant 0 : index
    %c0_8 = arith.constant 0 : index
    %16 = vector.load %arg3[%c0_7, %c0_8] : memref<1x32xf32, #tpu.memory_space<vmem>>, vector<1x32xf32>
    %17 = vector.broadcast %14 : vector<16x1xf32> to vector<16x32xf32>
    %18 = arith.mulf %6, %17 : vector<16x32xf32>
    %19 = vector.broadcast %15 : vector<1x32xf32> to vector<16x32xf32>
    %20 = arith.mulf %18, %19 : vector<16x32xf32>
    %21 = vector.broadcast %16 : vector<1x32xf32> to vector<16x32xf32>
    %22 = arith.addf %20, %21 : vector<16x32xf32>
    %c0_9 = arith.constant 0 : index
    %c0_10 = arith.constant 0 : index
    %23 = vector.load %arg4[%c0_9, %c0_10] : memref<16x32xf32, #tpu.memory_space<vmem>>, vector<16x32xf32>
    tpu.vector_store %arg4[%c0_9, %c0_10], %22 {strides = array<i32>} : memref<16x32xf32, #tpu.memory_space<vmem>>, vector<16x32xf32>,
    return
  }
  func.func @transform_0(%arg0: i32) -> (i32, i32) {
    %c0_i32 = arith.constant 0 : i32
    %c0_i32_0 = arith.constant 0 : i32
    return %arg0, %c0_i32 : i32, i32
  }
  func.func @transform_1(%arg0: i32) -> (i32, i32) {
    %c0_i32 = arith.constant 0 : i32
    %c0_i32_0 = arith.constant 0 : i32
    %c0_i32_1 = arith.constant 0 : i32
    return %c0_i32, %c0_i32_0 : i32, i32
  }
  func.func @transform_2(%arg0: i32) -> (i32, i32) {
    %c0_i32 = arith.constant 0 : i32
    %c0_i32_0 = arith.constant 0 : i32
    %c0_i32_1 = arith.constant 0 : i32
    return %c0_i32, %c0_i32_0 : i32, i32
  }
  func.func @transform_3(%arg0: i32) -> (i32, i32) {
    %c0_i32 = arith.constant 0 : i32
    %c0_i32_0 = arith.constant 0 : i32
    return %arg0, %c0_i32 : i32, i32
  }
}

</mosaic_0001>

<llo_original>
// kernel: tpu_custom_call.1
$region0: #{tpu_custom_call.1}
  #allocation0 [shape = 'u32[]', space=smem, size = 0x4, offset = 0x4, fixed_abs, tag = 'smem constant byte address 0x4 - core index']
  #allocation1 [shape = 'u32[72,128]{1,0:T(1,128)}', space=vmem, size = 0x9000, scoped, tag = 'internal scratch']
  %s0 = inlined_call_operand.hbm [shape: f32[16,32], index: 0, kind: input, shape index: {}]
  %s1 = inlined_call_operand.hbm [shape: f32[1,32], index: 1, kind: input, shape index: {}]
  %s2 = inlined_call_operand.vmem [shape: f32[1,32], index: 2, kind: input, shape index: {}]
  %s3 = inlined_call_operand.hbm [shape: f32[16,32], index: 3, kind: output, shape index: {}]
  %s4 = sld [smem:[#allocation0]]
  $region30: #{tpu_custom_call.1} parent=0
    _
  %s6 = ssub.s32 1, %s4
  %s7 = scalar_select 0, %s6, %s4
  $region1: #{tpu_custom_call.1} parent=0
    #allocation2 [shape = 'u8[8192]{0}', space=vmem, size = 0x2000, scoped, tag = 'input window, operand 0, single buffered']
    #allocation3 [shape = 's32[1]{0}', space=sflag, size = 0x4, scoped, tag = 'scoped memory for tpu_custom_call.1']
    #allocation4 [shape = 's32[1]{0}', space=sflag, size = 0x4, scoped, tag = 'scoped memory for tpu_custom_call.1']
    #allocation5 [shape = 'u8[512]{0}', space=vmem, size = 0x400, scoped, tag = 'input window, operand 1, single buffered']
    #allocation6 [shape = 's32[1]{0}', space=sflag, size = 0x4, scoped, tag = 'scoped memory for tpu_custom_call.1']
    #allocation7 [shape = 'u8[8192]{0}', space=vmem, size = 0x2000, scoped, tag = 'output window, operand 0, single buffered']
    %8 = vsyncpa [#allocation3], 0
    %9 = vsyncpa [#allocation6], 0
    %10 = vsyncpa [#allocation4], 0
    // Predicated region
    $region2: #{tpu_custom_call.1} parent=1 // pred_check
      _
    $region3: #{tpu_custom_call.1} parent=1 // pred_check_branch
      %12 = sbr.rel (0) target = $region5
    $region4: #{tpu_custom_call.1} parent=1 // pred_region
      %14 = vsyncadd [#allocation3], 0
      %s15 = sshll.u32 %s0, 4
      %s16 = int_to_ptr.hbm [resolvable:$true] %s15
      %s17 = sshll.u32 [#allocation2], 4
      %s18 = int_to_ptr.vmem [resolvable:$true] %s17
      %23 = dma.hbm_to_vmem [thread:$0]  %s16, 256, %s18, [#allocation3], 128, 128, 8
    $region5: #{tpu_custom_call.1} parent=1 // pred_fallthru
      _
    // Predicated region
    $region6: #{tpu_custom_call.1} parent=1 // pred_check
      _
    $region7: #{tpu_custom_call.1} parent=1 // pred_check_branch
      %25 = sbr.rel (0) target = $region9
    $region8: #{tpu_custom_call.1} parent=1 // pred_region
      %27 = vsyncadd [#allocation6], 0
      %s29 = sshll.u32 %s1, 4
      %s30 = int_to_ptr.hbm [resolvable:$true] %s29
      %s31 = sshll.u32 [#allocation5], 4
      %s32 = int_to_ptr.vmem [resolvable:$true] %s31
      %34 = dma.hbm_to_vmem [thread:$0]  %s30, 16, %s32, [#allocation6]
    $region9: #{tpu_custom_call.1} parent=1 // pred_fallthru
      _
    // Predicated region
    $region10: #{tpu_custom_call.1} parent=1 // pred_check
      _
    $region11: #{tpu_custom_call.1} parent=1 // pred_check_branch
      %36 = sbr.rel (0) target = $region13
    $region12: #{tpu_custom_call.1} parent=1 // pred_region
      _
    $region13: #{tpu_custom_call.1} parent=1 // pred_fallthru
      _
    // Predicated region
    $region14: #{tpu_custom_call.1} parent=1 // pred_check
      _
    $region15: #{tpu_custom_call.1} parent=1 // pred_check_branch
      %38 = sbr.rel (0) target = $region17
    $region16: #{tpu_custom_call.1} parent=1 // pred_region
      %40 = dma.done [#allocation3], 256
    $region17: #{tpu_custom_call.1} parent=1 // pred_fallthru
      _
    // Predicated region
    $region18: #{tpu_custom_call.1} parent=1 // pred_check
      _
    $region19: #{tpu_custom_call.1} parent=1 // pred_check_branch
      %42 = sbr.rel (0) target = $region21
    $region20: #{tpu_custom_call.1} parent=1 // pred_region
      %44 = dma.done [#allocation6], 16
    $region21: #{tpu_custom_call.1} parent=1 // pred_fallthru
      _
    %v45 = vld [vmem:[#allocation2] sm:$0xff]
    %v46 = vld [vmem:[#allocation2 + $0x8] sm:$0xff]
    %vm47 = vcmask 261120
    %v48 = vsel %vm47, %v45, 0.0
    %49 = vadd.xlane.f32.xlu0 %v48
    %v50 = vpop.xlane.xlu0 %49
    %v51 = vsel %vm47, %v46, 0.0
    %52 = vadd.xlane.f32.xlu0 %v51
    %v53 = vpop.xlane.xlu0 %52
    %v54 = vrcp.pop 32.0
    %v55 = vmul.f32 32.0, %v54
    %v56 = vsub.f32 1.0, %v55
    %v57 = vmul.f32 %v54, %v56
    %v58 = vadd.f32 %v54, %v57
    %vm59 = vweird.f32 %v54
    %v60 = vsel %vm59, %v54, %v58
    %v61 = vmul.f32 %v50, %v60
    %v62 = vmul.f32 %v53, %v60
    %v63 = vsub.f32 %v45, %v61
    %v64 = vsub.f32 %v46, %v62
    %v65 = vmul.f32 %v63, %v63
    %v66 = vmul.f32 %v64, %v64
    %v67 = vsel %vm47, %v65, 0.0
    %68 = vadd.xlane.f32.xlu0 %v67
    %v69 = vpop.xlane.xlu0 %68
    %v70 = vsel %vm47, %v66, 0.0
    %71 = vadd.xlane.f32.xlu0 %v70
    %v72 = vpop.xlane.xlu0 %71
    %v73 = vmul.f32 %v69, %v60
    %v74 = vmul.f32 %v72, %v60
    %v75 = vadd.f32 %v73, 1e-12
    %v76 = vadd.f32 %v74, 1e-12
    %v77 = vrsqrt.pop %v75
    %v78 = vmul.f32 %v77, %v75
    %v79 = vmul.f32 %v78, %v77
    %v80 = vmul.f32 0.5, %v79
    %v81 = vsub.f32 1.5, %v80
    %v82 = vmul.f32 %v77, %v81
    %vm83 = vweird.f32 %v75
    %vm84 = vweird.f32 %v77
    %vm85 = vmor %vm83, %vm84
    %v86 = vsel %vm85, %v77, %v82
    %v87 = vrsqrt.pop %v76
    %v88 = vmul.f32 %v87, %v76
    %v89 = vmul.f32 %v88, %v87
    %v90 = vmul.f32 0.5, %v89
    %v91 = vsub.f32 1.5, %v90
    %v92 = vmul.f32 %v87, %v91
    %vm93 = vweird.f32 %v76
    %vm94 = vweird.f32 %v87
    %vm95 = vmor %vm93, %vm94
    %v96 = vsel %vm95, %v87, %v92
    %v97 = vld [vmem:[#allocation5] sm:$0x1]
    %v98 = vld [vmem:[%s2] sm:$0x1]
    %v99 = vmul.f32 %v63, %v86
    %v100 = vmul.f32 %v64, %v96
    %v102 = vperm.slane %v97, 0
    %v104 = vmul.f32 %v99, %v102
    %v105 = vmul.f32 %v100, %v102
    %v107 = vperm.slane %v98, 0
    %v109 = vadd.f32 %v104, %v107
    %v110 = vadd.f32 %v105, %v107
    %111 = vst.msk [vmem:[#allocation7] sm:$0xff] %vm47, %v109
    %112 = vst.msk [vmem:[#allocation7 + $0x8] sm:$0xff] %vm47, %v110
    // Predicated region
    $region22: #{tpu_custom_call.1} parent=1 // pred_check
      _
    $region23: #{tpu_custom_call.1} parent=1 // pred_check_branch
      %114 = sbr.rel (0) target = $region25
    $region24: #{tpu_custom_call.1} parent=1 // pred_region
      %116 = vsyncadd [#allocation4], 0
      %s117 = sshll.u32 [#allocation7], 4
      %s118 = int_to_ptr.vmem [resolvable:$true] %s117
      %s119 = sshll.u32 %s3, 4
      %s120 = int_to_ptr.hbm [resolvable:$true] %s119
      %125 = dma.vmem_to_hbm [thread:$0]  %s118, 256, %s120, [#allocation4], 128, 128, 8
    $region25: #{tpu_custom_call.1} parent=1 // pred_fallthru
      _
    // Predicated region
    $region26: #{tpu_custom_call.1} parent=1 // pred_check
      _
    $region27: #{tpu_custom_call.1} parent=1 // pred_check_branch
      %127 = sbr.rel (0) target = $region29
    $region28: #{tpu_custom_call.1} parent=1 // pred_region
      %129 = dma.done [#allocation4], 256
    $region29: #{tpu_custom_call.1} parent=1 // pred_fallthru
      _
    %130 = vsyncpa [#allocation3], 1
    %131 = vsyncpa [#allocation6], 1
    %132 = vsyncpa [#allocation4], 1

</llo_original>
